<compile_context>
chip_gen: v7x
topology: tpu7x:2x2x1
jax: 0.10.0
libtpu: 0.0.40
codegen_flags: <defaults>
</compile_context>

<pallas_src>
import functools

import jax
import jax.numpy as jnp
from jax import lax
from jax.experimental import pallas as pl
from jax.experimental.pallas import tpu as pltpu

HIDDEN = 128  # fixed by the module: nn.Linear(vocab_size, 128)


def _kernel(x_ref, w1_ref, b1_ref, w2_ref, b2_ref,
            hid_ref, out_ref, logp_ref, acc_ref, *, num_labels):
    k = pl.program_id(1)
    nk = pl.num_programs(1)

    @pl.when(k == 0)
    def _():
        acc_ref[...] = jnp.zeros_like(acc_ref)

    # Layer-1 partial product: (TILE_B, TILE_V) @ (TILE_V, 128) on the MXU,
    # accumulated in the resident f32 scratch.
    acc_ref[...] += jnp.dot(x_ref[...], w1_ref[...],
                            preferred_element_type=jnp.float32)

    @pl.when(k == nk - 1)
    def _():
        # Layer-1 finalize: bias + clamp(min=0) (== ReLU), done exactly once.
        hidden = jnp.maximum(acc_ref[...] + b1_ref[...], 0.0)
        hid_ref[...] = hidden.astype(hid_ref.dtype)

        # Layer 2: contract hidden (TB, 128) with W2 (L, 128) on the LAST axes
        # so W2 stays in its lane-dense native layout.
        logits = lax.dot_general(
            hidden, w2_ref[...],
            dimension_numbers=(((1,), (1,)), ((), ())),
            preferred_element_type=jnp.float32)

        # Bias from SMEM scalars (avoids a padded (1, L) VMEM block).
        col = lax.broadcasted_iota(jnp.int32, logits.shape, 1)
        bias = jnp.zeros_like(logits)
        for c in range(num_labels):            # unrolled at trace time (L is tiny)
            bias = jnp.where(col == c, b2_ref[c], bias)
        logits = logits + bias
        out_ref[...] = logits.astype(out_ref.dtype)

        # Numerically-stable log_softmax over the class dim.
        m = jnp.max(logits, axis=1, keepdims=True)
        shifted = logits - m
        lse = jnp.log(jnp.sum(jnp.exp(shifted), axis=1, keepdims=True))
        logp_ref[...] = (shifted - lse).astype(logp_ref.dtype)


def _pick_tile(dim, cap, align):
    """Largest tile <= cap that divides `dim` and is `align`-aligned."""
    if dim <= cap:
        return dim
    t = (cap // align) * align
    while t >= align:
        if dim % t == 0:
            return t
        t -= align
    return dim  # fallback: single block along this axis


def advanced_uncertainty_predictor(feature_vec, w1, b1, w2, b2,
                                   return_all_layers=False,
                                   tile_b=None, tile_v=None,
                                   vmem_limit_bytes=48 << 20):
    """feature_vec: (B, V) f32; w1: (128, V) torch layout; b1: (128,);
    w2: (num_labels, 128) torch layout; b2: (num_labels,)."""
    B, V = feature_vec.shape
    H, V2 = w1.shape
    L, H2 = w2.shape
    assert H == HIDDEN and V2 == V and H2 == H
    assert b1.shape == (H,) and b2.shape == (L,)

    # Double-buffered x tiles dominate VMEM: 2 * TILE_B * TILE_V * 4 bytes plus
    # 2 * TILE_V * 128 * 4 for the W1 tile.  512 x 4096 keeps this ~20 MiB,
    # which fits every generation (incl. v7x's 64 MiB physical VMEM).
    if tile_b is None:
        tile_b = _pick_tile(B, 512, 8)
    if tile_v is None:
        tile_v = _pick_tile(V, 4096, 128)

    w1_t = jnp.asarray(w1).T                  # (V, 128): lane-dense tiles
    b1_2d = jnp.asarray(b1).reshape(1, H)     # (1, 128): resident in VMEM
    w2 = jnp.asarray(w2)                      # (L, 128): native lane-dense layout
    b2 = jnp.asarray(b2)                      # (L,): goes to SMEM

    grid = (B // tile_b, V // tile_v)
    kernel = functools.partial(_kernel, num_labels=L)

    out_shapes = (
        jax.ShapeDtypeStruct((B, H), jnp.float32),   # hidden1
        jax.ShapeDtypeStruct((B, L), jnp.float32),   # output (logits)
        jax.ShapeDtypeStruct((B, L), jnp.float32),   # log_softmax
    )

    cost = pl.CostEstimate(
        flops=2 * B * V * H + 2 * B * H * L,
        transcendentals=B * L,
        bytes_accessed=4 * (B * V + V * H + H + H * L + L + B * H + 2 * B * L),
    )

    hidden1, output, log_softmax = pl.pallas_call(
        kernel,
        out_shape=out_shapes,
        grid_spec=pltpu.PrefetchScalarGridSpec(
            num_scalar_prefetch=0,
            grid=grid,
            in_specs=[
                pl.BlockSpec((tile_b, tile_v), lambda i, k: (i, k)),   # x
                pl.BlockSpec((tile_v, H), lambda i, k: (k, 0)),        # W1^T tile
                pl.BlockSpec((1, H), lambda i, k: (0, 0)),             # b1 (resident)
                pl.BlockSpec((L, H), lambda i, k: (0, 0)),             # W2 (resident)
                pl.BlockSpec(memory_space=pltpu.MemorySpace.SMEM),     # b2 scalars
            ],
            out_specs=(
                pl.BlockSpec((tile_b, H), lambda i, k: (i, 0)),
                pl.BlockSpec((tile_b, L), lambda i, k: (i, 0)),
                pl.BlockSpec((tile_b, L), lambda i, k: (i, 0)),
            ),
            scratch_shapes=[pltpu.VMEM((tile_b, H), jnp.float32)],
        ),
        compiler_params=pltpu.CompilerParams(
            dimension_semantics=("parallel", "arbitrary"),
            vmem_limit_bytes=vmem_limit_bytes,
        ),
        cost_estimate=cost,
    )(feature_vec, w1_t, b1_2d, w2, b2)

    if return_all_layers:
        return [hidden1, output, log_softmax]
    return log_softmax


def _reference(feature_vec, w1, b1, w2, b2):
    hidden1 = jnp.maximum(feature_vec @ w1.T + b1, 0.0)
    output = hidden1 @ w2.T + b2
    return hidden1, output, jax.nn.log_softmax(output, axis=1)


if __name__ == "__main__":
    key = jax.random.PRNGKey(0)
    k_x, k_w1, k_b1, k_w2, k_b2 = jax.random.split(key, 5)

    batch, vocab_size, num_labels = 16, 512, 2

    feature_vec = jax.random.normal(k_x, (batch, vocab_size), dtype=jnp.float32)
    bound1 = 1.0 / (vocab_size ** 0.5)
    w1 = jax.random.uniform(k_w1, (HIDDEN, vocab_size), minval=-bound1,
                            maxval=bound1, dtype=jnp.float32)
    b1 = jax.random.uniform(k_b1, (HIDDEN,), minval=-bound1, maxval=bound1,
                            dtype=jnp.float32)
    bound2 = 1.0 / (HIDDEN ** 0.5)
    w2 = jax.random.uniform(k_w2, (num_labels, HIDDEN), minval=-bound2,
                            maxval=bound2, dtype=jnp.float32)
    b2 = jax.random.uniform(k_b2, (num_labels,), minval=-bound2, maxval=bound2,
                            dtype=jnp.float32)

    # Single-tile path.
    log_softmax = advanced_uncertainty_predictor(feature_vec, w1, b1, w2, b2)
    jax.block_until_ready(log_softmax)

    hid_ref, out_ref, lp_ref = _reference(feature_vec, w1, b1, w2, b2)
    assert jnp.allclose(log_softmax, lp_ref, atol=1e-5, rtol=1e-5), "log_softmax mismatch"

    # return_all_layers path.
    hid, out, lp = advanced_uncertainty_predictor(feature_vec, w1, b1, w2, b2,
                                                  return_all_layers=True)
    jax.block_until_ready((hid, out, lp))
    assert jnp.allclose(hid, hid_ref, atol=1e-4, rtol=1e-5), "hidden1 mismatch"
    assert jnp.allclose(out, out_ref, atol=1e-4, rtol=1e-5), "output mismatch"
    assert jnp.allclose(lp, lp_ref, atol=1e-5, rtol=1e-5), "log_softmax mismatch (all layers)"

    # Exercise the tiled batch grid + V-reduction accumulation path.
    lp_tiled = advanced_uncertainty_predictor(feature_vec, w1, b1, w2, b2,
                                              tile_b=8, tile_v=128)
    jax.block_until_ready(lp_tiled)
    assert jnp.allclose(lp_tiled, lp_ref, atol=1e-5, rtol=1e-5), "tiled path mismatch"

    print("KERNEL_OK")
</pallas_src>

<mosaic_0001>
module attributes {stable_mosaic.version = 11 : i64} {
  func.func @_kernel(%arg0: i32, %arg1: i32, %arg2: memref<16x512xf32, #tpu.memory_space<vmem>>, %arg3: memref<512x128xf32, #tpu.memory_space<vmem>>, %arg4: memref<1x128xf32, #tpu.memory_space<vmem>>, %arg5: memref<2x128xf32, #tpu.memory_space<vmem>>, %arg6: memref<2xf32, #tpu.memory_space<smem>>, %arg7: memref<16x128xf32, #tpu.memory_space<vmem>>, %arg8: memref<16x2xf32, #tpu.memory_space<vmem>>, %arg9: memref<16x2xf32, #tpu.memory_space<vmem>>, %arg10: memref<16x128xf32, #tpu.memory_space<vmem>>) attributes {dimension_semantics = [#tpu.dimension_semantics<parallel>, #tpu.dimension_semantics<arbitrary>], iteration_bounds = array<i64: 1, 1>, scalar_prefetch = 0 : i64, scratch_operands = 1 : i64, tpu.core_type = #tpu.core_type<tc>, window_params = [{transform_indices = @transform_0, window_bounds = array<i64: 16, 512>}, {transform_indices = @transform_1, window_bounds = array<i64: 512, 128>}, {pipeline_mode = #tpu.pipeline_mode<synchronous>, transform_indices = @transform_2, window_bounds = array<i64: 1, 128>}, {pipeline_mode = #tpu.pipeline_mode<synchronous>, transform_indices = @transform_3, window_bounds = array<i64: 2, 128>}, {transform_indices = @transform_4, window_bounds = array<i64: 2>}, {transform_indices = @transform_5, window_bounds = array<i64: 16, 128>}, {transform_indices = @transform_6, window_bounds = array<i64: 16, 2>}, {transform_indices = @transform_7, window_bounds = array<i64: 16, 2>}]} {
    %c0_i32 = arith.constant 0 : i32
    %0 = arith.cmpi eq, %arg1, %c0_i32 : i32
    %1 = arith.extui %0 : i1 to i32
    %c0_i32_0 = arith.constant 0 : i32
    %2 = arith.cmpi ne, %1, %c0_i32_0 : i32
    scf.if %2 {
      %cst_10 = arith.constant 0.000000e+00 : f32
      %12 = vector.broadcast %cst_10 : f32 to vector<16x128xf32>
      %c0_11 = arith.constant 0 : index
      %c0_12 = arith.constant 0 : index
      %13 = vector.load %arg10[%c0_11, %c0_12] : memref<16x128xf32, #tpu.memory_space<vmem>>, vector<16x128xf32>
      tpu.vector_store %arg10[%c0_11, %c0_12], %12 {strides = array<i32>} : memref<16x128xf32, #tpu.memory_space<vmem>>, vector<16x128xf32>,
    } else {
    }
    %c0 = arith.constant 0 : index
    %c0_1 = arith.constant 0 : index
    %3 = vector.load %arg10[%c0, %c0_1] : memref<16x128xf32, #tpu.memory_space<vmem>>, vector<16x128xf32>
    %c0_2 = arith.constant 0 : index
    %c0_3 = arith.constant 0 : index
    %4 = vector.load %arg2[%c0_2, %c0_3] : memref<16x512xf32, #tpu.memory_space<vmem>>, vector<16x512xf32>
    %c0_4 = arith.constant 0 : index
    %c0_5 = arith.constant 0 : index
    %5 = vector.load %arg3[%c0_4, %c0_5] : memref<512x128xf32, #tpu.memory_space<vmem>>, vector<512x128xf32>
    %cst = arith.constant dense<0.000000e+00> : vector<16x128xf32>
    %6 = tpu.matmul %4, %5, %cst {dimension_numbers = #tpu.dot_dimension_numbers<[1], [0], [0], [1], [0, 0, 1, 1], [], []>} : vector<16x512xf32>, vector<512x128xf32>, vector<16x128xf32> -> vector<16x128xf32>
    %7 = arith.addf %3, %6 : vector<16x128xf32>
    %c0_6 = arith.constant 0 : index
    %c0_7 = arith.constant 0 : index
    %8 = vector.load %arg10[%c0_6, %c0_7] : memref<16x128xf32, #tpu.memory_space<vmem>>, vector<16x128xf32>
    tpu.vector_store %arg10[%c0_6, %c0_7], %7 {strides = array<i32>} : memref<16x128xf32, #tpu.memory_space<vmem>>, vector<16x128xf32>,
    %c0_i32_8 = arith.constant 0 : i32
    %9 = arith.cmpi eq, %arg1, %c0_i32_8 : i32
    %10 = arith.extui %9 : i1 to i32
    %c0_i32_9 = arith.constant 0 : i32
    %11 = arith.cmpi ne, %10, %c0_i32_9 : i32
    scf.if %11 {
      %c0_10 = arith.constant 0 : index
      %c0_11 = arith.constant 0 : index
      %12 = vector.load %arg10[%c0_10, %c0_11] : memref<16x128xf32, #tpu.memory_space<vmem>>, vector<16x128xf32>
      %c0_12 = arith.constant 0 : index
      %c0_13 = arith.constant 0 : index
      %13 = vector.load %arg4[%c0_12, %c0_13] : memref<1x128xf32, #tpu.memory_space<vmem>>, vector<1x128xf32>
      %14 = vector.broadcast %13 : vector<1x128xf32> to vector<16x128xf32>
      %15 = arith.addf %12, %14 : vector<16x128xf32>
      %cst_14 = arith.constant 0.000000e+00 : f32
      %16 = vector.broadcast %cst_14 : f32 to vector<16x128xf32>
      %17 = arith.maximumf %15, %16 : vector<16x128xf32>
      %c0_15 = arith.constant 0 : index
      %c0_16 = arith.constant 0 : index
      %18 = vector.load %arg7[%c0_15, %c0_16] : memref<16x128xf32, #tpu.memory_space<vmem>>, vector<16x128xf32>
      tpu.vector_store %arg7[%c0_15, %c0_16], %17 {strides = array<i32>} : memref<16x128xf32, #tpu.memory_space<vmem>>, vector<16x128xf32>,
      %c0_17 = arith.constant 0 : index
      %c0_18 = arith.constant 0 : index
      %19 = vector.load %arg5[%c0_17, %c0_18] : memref<2x128xf32, #tpu.memory_space<vmem>>, vector<2x128xf32>
      %cst_19 = arith.constant dense<0.000000e+00> : vector<16x2xf32>
      %20 = tpu.matmul %17, %19, %cst_19 {dimension_numbers = #tpu.dot_dimension_numbers<[1], [1], [0], [0], [0, 0, 1, 0], [], []>} : vector<16x128xf32>, vector<2x128xf32>, vector<16x2xf32> -> vector<16x2xf32>
      %21 = tpu.iota {dimensions = array<i32: 1>} : vector<16x2xi32>
      %cst_20 = arith.constant 0.000000e+00 : f32
      %22 = vector.broadcast %cst_20 : f32 to vector<16x2xf32>
      %c0_i32_21 = arith.constant 0 : i32
      %23 = vector.broadcast %c0_i32_21 : i32 to vector<16x2xi32>
      %24 = arith.cmpi eq, %21, %23 : vector<16x2xi32>
      %c0_22 = arith.constant 0 : index
      %25 = memref.load %arg6[%c0_22] : memref<2xf32, #tpu.memory_space<smem>>
      %26 = vector.broadcast %25 : f32 to vector<16x2xf32>
      %27 = arith.select %24, %26, %22 : vector<16x2xi1>, vector<16x2xf32>
      %c1_i32 = arith.constant 1 : i32
      %28 = vector.broadcast %c1_i32 : i32 to vector<16x2xi32>
      %29 = arith.cmpi eq, %21, %28 : vector<16x2xi32>
      %c1 = arith.constant 1 : index
      %30 = memref.load %arg6[%c1] : memref<2xf32, #tpu.memory_space<smem>>
      %31 = vector.broadcast %30 : f32 to vector<16x2xf32>
      %32 = arith.select %29, %31, %27 : vector<16x2xi1>, vector<16x2xf32>
      %33 = arith.addf %20, %32 : vector<16x2xf32>
      %c0_23 = arith.constant 0 : index
      %c0_24 = arith.constant 0 : index
      %34 = vector.load %arg8[%c0_23, %c0_24] : memref<16x2xf32, #tpu.memory_space<vmem>>, vector<16x2xf32>
      tpu.vector_store %arg8[%c0_23, %c0_24], %33 {strides = array<i32>} : memref<16x2xf32, #tpu.memory_space<vmem>>, vector<16x2xf32>,
      %cst_25 = arith.constant dense<0xFF800000> : vector<16xf32>
      %35 = vector.multi_reduction <maximumf>, %33, %cst_25 [1] : vector<16x2xf32> to vector<16xf32>
      %36 = vector.shape_cast %35 : vector<16xf32> to vector<16x1xf32>
      %37 = vector.broadcast %36 : vector<16x1xf32> to vector<16x2xf32>
      %38 = arith.subf %33, %37 : vector<16x2xf32>
      %39 = math.exp %38 : vector<16x2xf32>
      %cst_26 = arith.constant dense<0.000000e+00> : vector<16xf32>
      %40 = vector.multi_reduction <add>, %39, %cst_26 [1] : vector<16x2xf32> to vector<16xf32>
      %41 = vector.shape_cast %40 : vector<16xf32> to vector<16x1xf32>
      %42 = math.log %41 : vector<16x1xf32>
      %43 = vector.broadcast %42 : vector<16x1xf32> to vector<16x2xf32>
      %44 = arith.subf %38, %43 : vector<16x2xf32>
      %c0_27 = arith.constant 0 : index
      %c0_28 = arith.constant 0 : index
      %45 = vector.load %arg9[%c0_27, %c0_28] : memref<16x2xf32, #tpu.memory_space<vmem>>, vector<16x2xf32>
      tpu.vector_store %arg9[%c0_27, %c0_28], %44 {strides = array<i32>} : memref<16x2xf32, #tpu.memory_space<vmem>>, vector<16x2xf32>,
    } else {
    }
    return
  }
  func.func @transform_0(%arg0: i32, %arg1: i32) -> (i32, i32) {
    %c0_i32 = arith.constant 0 : i32
    return %arg0, %arg1 : i32, i32
  }
  func.func @transform_1(%arg0: i32, %arg1: i32) -> (i32, i32) {
    %c0_i32 = arith.constant 0 : i32
    %c0_i32_0 = arith.constant 0 : i32
    return %arg1, %c0_i32 : i32, i32
  }
  func.func @transform_2(%arg0: i32, %arg1: i32) -> (i32, i32) {
    %c0_i32 = arith.constant 0 : i32
    %c0_i32_0 = arith.constant 0 : i32
    %c0_i32_1 = arith.constant 0 : i32
    return %c0_i32, %c0_i32_0 : i32, i32
  }
  func.func @transform_3(%arg0: i32, %arg1: i32) -> (i32, i32) {
    %c0_i32 = arith.constant 0 : i32
    %c0_i32_0 = arith.constant 0 : i32
    %c0_i32_1 = arith.constant 0 : i32
    return %c0_i32, %c0_i32_0 : i32, i32
  }
  func.func @transform_4(%arg0: i32, %arg1: i32) -> i32 {
    %c0_i32 = arith.constant 0 : i32
    %c0_i32_0 = arith.constant 0 : i32
    return %c0_i32 : i32
  }
  func.func @transform_5(%arg0: i32, %arg1: i32) -> (i32, i32) {
    %c0_i32 = arith.constant 0 : i32
    %c0_i32_0 = arith.constant 0 : i32
    return %arg0, %c0_i32 : i32, i32
  }
  func.func @transform_6(%arg0: i32, %arg1: i32) -> (i32, i32) {
    %c0_i32 = arith.constant 0 : i32
    %c0_i32_0 = arith.constant 0 : i32
    return %arg0, %c0_i32 : i32, i32
  }
  func.func @transform_7(%arg0: i32, %arg1: i32) -> (i32, i32) {
    %c0_i32 = arith.constant 0 : i32
    %c0_i32_0 = arith.constant 0 : i32
    return %arg0, %c0_i32 : i32, i32
  }
}

</mosaic_0001>

<llo_original>
// kernel: tpu_custom_call.1
$region0: #{tpu_custom_call.1}
  #allocation0 [shape = 'u32[]', space=smem, size = 0x4, offset = 0x4, fixed_abs, tag = 'smem constant byte address 0x4 - core index']
  #allocation1 [shape = 'u32[144,128]{1,0:T(1,128)}', space=vmem, size = 0x12000, scoped, tag = 'internal scratch']
  #allocation2 [shape = 'f32[16,128]{1,0:T(8,128)}', space=vmem, size = 0x2000, scoped, tag = 'scratch operand']
  %s0 = inlined_call_operand.hbm [shape: f32[16,512], index: 0, kind: input, shape index: {}]
  %s1 = inlined_call_operand.hbm [shape: f32[512,128], index: 1, kind: input, shape index: {}]
  %s2 = inlined_call_operand.vmem [shape: f32[1,128], index: 2, kind: input, shape index: {}]
  %s3 = inlined_call_operand.vmem [shape: f32[2,128], index: 3, kind: input, shape index: {}]
  %s4 = inlined_call_operand.vmem [shape: f32[2], index: 4, kind: input, shape index: {}]
  %s5 = inlined_call_operand.hbm [shape: f32[16,128], index: 5, kind: output, shape index: {0}]
  %s6 = inlined_call_operand.vmem [shape: f32[16,2], index: 6, kind: output, shape index: {1}]
  %s7 = inlined_call_operand.vmem [shape: f32[16,2], index: 7, kind: output, shape index: {2}]
  %8 = xla_tuple %s5, %s6, %s7
  %s9 = sld [smem:[#allocation0]]
  $region66: #{tpu_custom_call.1} parent=0
    _
  %s11 = ssub.s32 1, %s9
  %s12 = scalar_select 0, %s11, %s9
  $region1: #{tpu_custom_call.1} parent=0
    #allocation3 [shape = 'u8[32768]{0}', space=vmem, size = 0x8000, scoped, tag = 'input window, operand 0, single buffered']
    #allocation4 [shape = 's32[1]{0}', space=sflag, size = 0x4, scoped, tag = 'scoped memory for tpu_custom_call.1']
    #allocation5 [shape = 's32[1]{0}', space=sflag, size = 0x4, scoped, tag = 'scoped memory for tpu_custom_call.1']
    #allocation6 [shape = 's32[1]{0}', space=sflag, size = 0x4, scoped, tag = 'scoped memory for tpu_custom_call.1']
    #allocation7 [shape = 'u8[262144]{0}', space=vmem, size = 0x40000, scoped, tag = 'input window, operand 1, single buffered']
    #allocation8 [shape = 's32[1]{0}', space=sflag, size = 0x4, scoped, tag = 'scoped memory for tpu_custom_call.1']
    #allocation9 [shape = 'u8[512]{0}', space=smem, size = 0x200, scoped, tag = 'input window, operand 4, single buffered']
    #allocation10 [shape = 'u8[8192]{0}', space=vmem, size = 0x2000, scoped, tag = 'output window, operand 0, single buffered']
    %13 = vsyncpa [#allocation4], 0
    %14 = vsyncpa [#allocation8], 0
    %15 = vsyncpa [#allocation6], 0
    %16 = vsyncpa [#allocation5], 0
    // Predicated region
    $region2: #{tpu_custom_call.1} parent=1 // pred_check
      _
    $region3: #{tpu_custom_call.1} parent=1 // pred_check_branch
      %18 = sbr.rel (0) target = $region5
    $region4: #{tpu_custom_call.1} parent=1 // pred_region
      %s20 = ssub.s32 1024, 1024
      %21 = vsyncadd [#allocation4], %s20
      %s22 = sshll.u32 [#allocation3], 4
      %s23 = int_to_ptr.vmem [resolvable:$true] %s22
      %28 = dma.hbm_to_vmem [thread:$0]  %s0, 1024, %s23, [#allocation4], 512, 512, 32
    $region5: #{tpu_custom_call.1} parent=1 // pred_fallthru
      _
    // Predicated region
    $region6: #{tpu_custom_call.1} parent=1 // pred_check
      _
    $region7: #{tpu_custom_call.1} parent=1 // pred_check_branch
      %30 = sbr.rel (0) target = $region9
    $region8: #{tpu_custom_call.1} parent=1 // pred_region
      %s32 = ssub.s32 8192, 8192
      %33 = vsyncadd [#allocation8], %s32
      %s34 = sshll.u32 [#allocation7], 4
      %s35 = int_to_ptr.vmem [resolvable:$true] %s34
      %40 = dma.hbm_to_vmem [thread:$0]  %s1, 8192, %s35, [#allocation8], 128, 128, 8
    $region9: #{tpu_custom_call.1} parent=1 // pred_fallthru
      _
    // Predicated region
    $region10: #{tpu_custom_call.1} parent=1 // pred_check
      _
    $region11: #{tpu_custom_call.1} parent=1 // pred_check_branch
      %42 = sbr.rel (0) target = $region13
    $region12: #{tpu_custom_call.1} parent=1 // pred_region
      _
    $region13: #{tpu_custom_call.1} parent=1 // pred_fallthru
      _
    // Predicated region
    $region14: #{tpu_custom_call.1} parent=1 // pred_check
      _
    $region15: #{tpu_custom_call.1} parent=1 // pred_check_branch
      %44 = sbr.rel (0) target = $region17
    $region16: #{tpu_custom_call.1} parent=1 // pred_region
      _
    $region17: #{tpu_custom_call.1} parent=1 // pred_fallthru
      _
    // Predicated region
    $region18: #{tpu_custom_call.1} parent=1 // pred_check
      _
    $region19: #{tpu_custom_call.1} parent=1 // pred_check_branch
      %46 = sbr.rel (0) target = $region21
    $region20: #{tpu_custom_call.1} parent=1 // pred_region
      %s48 = ssub.s32 16, 16
      %49 = vsyncadd [#allocation6], %s48
      %s51 = sshll.u32 %s4, 4
      %s52 = int_to_ptr.vmem [resolvable:$true] %s51
      %54 = dma.vmem_to_smem %s52, 16, [#allocation9], [#allocation6]
    $region21: #{tpu_custom_call.1} parent=1 // pred_fallthru
      _
    // Predicated region
    $region22: #{tpu_custom_call.1} parent=1 // pred_check
      _
    $region23: #{tpu_custom_call.1} parent=1 // pred_check_branch
      %56 = sbr.rel (0) target = $region25
    $region24: #{tpu_custom_call.1} parent=1 // pred_region
      %57 = dma.done [#allocation4], 1024
    $region25: #{tpu_custom_call.1} parent=1 // pred_fallthru
      _
    // Predicated region
    $region26: #{tpu_custom_call.1} parent=1 // pred_check
      _
    $region27: #{tpu_custom_call.1} parent=1 // pred_check_branch
      %59 = sbr.rel (0) target = $region29
    $region28: #{tpu_custom_call.1} parent=1 // pred_region
      %60 = dma.done [#allocation8], 8192
    $region29: #{tpu_custom_call.1} parent=1 // pred_fallthru
      _
    // Predicated region
    $region30: #{tpu_custom_call.1} parent=1 // pred_check
      _
    $region31: #{tpu_custom_call.1} parent=1 // pred_check_branch
      %62 = sbr.rel (0) target = $region33
    $region32: #{tpu_custom_call.1} parent=1 // pred_region
      %63 = dma.done [#allocation6], 16
    $region33: #{tpu_custom_call.1} parent=1 // pred_fallthru
      _
    %64 = sfence
    %p65 = scmp.eq.s32.totalorder 0, 0
    // Predicated region
    $region34: #{tpu_custom_call.1} parent=1 // pred_check
      %p66 = pneg %p65
    $region35: #{tpu_custom_call.1} parent=1 // pred_check_branch
      %68 = sbr.rel (%p66) target = $region37
    $region36: #{tpu_custom_call.1} parent=1 // pred_region
      %69 = vst [vmem:[#allocation2] sm:$0xff] 0.0
      %70 = vst [vmem:[#allocation2 + $0x8] sm:$0xff] 0.0
    $region37: #{tpu_custom_call.1} parent=1 // pred_fallthru
      _
    %v71 = vld [vmem:[#allocation2] sm:$0xff]
    %v72 = vld [vmem:[#allocation2 + $0x8] sm:$0xff]
    %v73 = vld [vmem:[#allocation3] sm:$0xff]
    %v74 = vld [vmem:[#allocation3 + $0x8] sm:$0xff]
    %v75 = vld [vmem:[#allocation3 + $0x10] sm:$0xff]
    %v76 = vld [vmem:[#allocation3 + $0x18] sm:$0xff]
    %v77 = vld [vmem:[#allocation3 + $0x20] sm:$0xff]
    %v78 = vld [vmem:[#allocation3 + $0x28] sm:$0xff]
    %v79 = vld [vmem:[#allocation3 + $0x30] sm:$0xff]
    %v80 = vld [vmem:[#allocation3 + $0x38] sm:$0xff]
    %v81 = vld [vmem:[#allocation7] sm:$0xff]
    %v82 = vld [vmem:[#allocation7 + $0x8] sm:$0xff]
    %v83 = vld [vmem:[#allocation7 + $0x10] sm:$0xff]
    %v84 = vld [vmem:[#allocation7 + $0x18] sm:$0xff]
    %v85 = vld [vmem:[#allocation7 + $0x20] sm:$0xff]
    %v86 = vld [vmem:[#allocation7 + $0x28] sm:$0xff]
    %v87 = vld [vmem:[#allocation7 + $0x30] sm:$0xff]
    %v88 = vld [vmem:[#allocation7 + $0x38] sm:$0xff]
    %v89 = vld [vmem:[#allocation7 + $0x40] sm:$0xff]
    %v90 = vld [vmem:[#allocation7 + $0x48] sm:$0xff]
    %v91 = vld [vmem:[#allocation7 + $0x50] sm:$0xff]
    %v92 = vld [vmem:[#allocation7 + $0x58] sm:$0xff]
    %v93 = vld [vmem:[#allocation7 + $0x60] sm:$0xff]
    %v94 = vld [vmem:[#allocation7 + $0x68] sm:$0xff]
    %v95 = vld [vmem:[#allocation7 + $0x70] sm:$0xff]
    %v96 = vld [vmem:[#allocation7 + $0x78] sm:$0xff]
    %v97 = vld [vmem:[#allocation7 + $0x80] sm:$0xff]
    %v98 = vld [vmem:[#allocation7 + $0x88] sm:$0xff]
    %v99 = vld [vmem:[#allocation7 + $0x90] sm:$0xff]
    %v100 = vld [vmem:[#allocation7 + $0x98] sm:$0xff]
    %v101 = vld [vmem:[#allocation7 + $0xa0] sm:$0xff]
    %v102 = vld [vmem:[#allocation7 + $0xa8] sm:$0xff]
    %v103 = vld [vmem:[#allocation7 + $0xb0] sm:$0xff]
    %v104 = vld [vmem:[#allocation7 + $0xb8] sm:$0xff]
    %v105 = vld [vmem:[#allocation7 + $0xc0] sm:$0xff]
    %v106 = vld [vmem:[#allocation7 + $0xc8] sm:$0xff]
    %v107 = vld [vmem:[#allocation7 + $0xd0] sm:$0xff]
    %v108 = vld [vmem:[#allocation7 + $0xd8] sm:$0xff]
    %v109 = vld [vmem:[#allocation7 + $0xe0] sm:$0xff]
    %v110 = vld [vmem:[#allocation7 + $0xe8] sm:$0xff]
    %v111 = vld [vmem:[#allocation7 + $0xf0] sm:$0xff]
    %v112 = vld [vmem:[#allocation7 + $0xf8] sm:$0xff]
    %v113 = vld [vmem:[#allocation7 + $0x100] sm:$0xff]
    %v114 = vld [vmem:[#allocation7 + $0x108] sm:$0xff]
    %v115 = vld [vmem:[#allocation7 + $0x110] sm:$0xff]
    %v116 = vld [vmem:[#allocation7 + $0x118] sm:$0xff]
    %v117 = vld [vmem:[#allocation7 + $0x120] sm:$0xff]
    %v118 = vld [vmem:[#allocation7 + $0x128] sm:$0xff]
    %v119 = vld [vmem:[#allocation7 + $0x130] sm:$0xff]
    %v120 = vld [vmem:[#allocation7 + $0x138] sm:$0xff]
    %v121 = vld [vmem:[#allocation7 + $0x140] sm:$0xff]
    %v122 = vld [vmem:[#allocation7 + $0x148] sm:$0xff]
    %v123 = vld [vmem:[#allocation7 + $0x150] sm:$0xff]
    %v124 = vld [vmem:[#allocation7 + $0x158] sm:$0xff]
    %v125 = vld [vmem:[#allocation7 + $0x160] sm:$0xff]
    %v126 = vld [vmem:[#allocation7 + $0x168] sm:$0xff]
    %v127 = vld [vmem:[#allocation7 + $0x170] sm:$0xff]
    %v128 = vld [vmem:[#allocation7 + $0x178] sm:$0xff]
    %v129 = vld [vmem:[#allocation7 + $0x180] sm:$0xff]
    %v130 = vld [vmem:[#allocation7 + $0x188] sm:$0xff]
    %v131 = vld [vmem:[#allocation7 + $0x190] sm:$0xff]
    %v132 = vld [vmem:[#allocation7 + $0x198] sm:$0xff]
    %v133 = vld [vmem:[#allocation7 + $0x1a0] sm:$0xff]
    %v134 = vld [vmem:[#allocation7 + $0x1a8] sm:$0xff]
    %v135 = vld [vmem:[#allocation7 + $0x1b0] sm:$0xff]
    %v136 = vld [vmem:[#allocation7 + $0x1b8] sm:$0xff]
    %v137 = vld [vmem:[#allocation7 + $0x1c0] sm:$0xff]
    %v138 = vld [vmem:[#allocation7 + $0x1c8] sm:$0xff]
    %v139 = vld [vmem:[#allocation7 + $0x1d0] sm:$0xff]
    %v140 = vld [vmem:[#allocation7 + $0x1d8] sm:$0xff]
    %v141 = vld [vmem:[#allocation7 + $0x1e0] sm:$0xff]
    %v142 = vld [vmem:[#allocation7 + $0x1e8] sm:$0xff]
    %v143 = vld [vmem:[#allocation7 + $0x1f0] sm:$0xff]
    %v144 = vld [vmem:[#allocation7 + $0x1f8] sm:$0xff]
    %145 = vmatprep.subr.mxu0 0.0
    %146 = vmatpush1.msra.mxu0 %v81
    %147 = vmatprep.subr.mxu0 0.0
    %148 = vmatpush1.msra.mxu0 %v82
    %149 = vmatprep.subr.mxu0 0.0
    %150 = vmatpush1.msra.mxu0 %v83
    %151 = vmatprep.subr.mxu0 0.0
    %152 = vmatpush1.msra.mxu0 %v84
    %153 = vmatprep.subr.mxu0 0.0
    %154 = vmatpush1.msra.mxu0 %v85
    %155 = vmatprep.subr.mxu0 0.0
    %156 = vmatpush1.msra.mxu0 %v86
    %157 = vmatprep.subr.mxu0 0.0
    %158 = vmatpush1.msra.mxu0 %v87
    %159 = vmatprep.subr.mxu0 0.0
    %160 = vmatpush1.msra.mxu0 %v88
    %161 = vmatprep.subr.mxu0 0.0
    %162 = vmatpush1.msra.mxu0 %v89
    %163 = vmatprep.subr.mxu0 0.0
    %164 = vmatpush1.msra.mxu0 %v90
    %165 = vmatprep.subr.mxu0 0.0
    %166 = vmatpush1.msra.mxu0 %v91
    %167 = vmatprep.subr.mxu0 0.0
    %168 = vmatpush1.msra.mxu0 %v92
    %169 = vmatprep.subr.mxu0 0.0
    %170 = vmatpush1.msra.mxu0 %v93
    %171 = vmatprep.subr.mxu0 0.0
    %172 = vmatpush1.msra.mxu0 %v94
    %173 = vmatprep.subr.mxu0 0.0
    %174 = vmatpush1.msra.mxu0 %v95
    %175 = vmatprep.subr.mxu0 0.0
    %176 = vmatpush1.msra.mxu0 %v96
    %177 = vmatprep.subr.mxu0 0.0
    %178 = vmatpush1.msra.mxu0 %v97
    %179 = vmatprep.subr.mxu0 0.0
    %180 = vmatpush1.msra.mxu0 %v98
    %181 = vmatprep.subr.mxu0 0.0
    %182 = vmatpush1.msra.mxu0 %v99
    %183 = vmatprep.subr.mxu0 0.0
    %184 = vmatpush1.msra.mxu0 %v100
    %185 = vmatprep.subr.mxu0 0.0
    %186 = vmatpush1.msra.mxu0 %v101
    %187 = vmatprep.subr.mxu0 0.0
    %188 = vmatpush1.msra.mxu0 %v102
    %189 = vmatprep.subr.mxu0 0.0
    %190 = vmatpush1.msra.mxu0 %v103
    %191 = vmatprep.subr.mxu0 0.0
    %192 = vmatpush1.msra.mxu0 %v104
    %193 = vmatprep.subr.mxu0 0.0
    %194 = vmatpush1.msra.mxu0 %v105
    %195 = vmatprep.subr.mxu0 0.0
    %196 = vmatpush1.msra.mxu0 %v106
    %197 = vmatprep.subr.mxu0 0.0
    %198 = vmatpush1.msra.mxu0 %v107
    %199 = vmatprep.subr.mxu0 0.0
    %200 = vmatpush1.msra.mxu0 %v108
    %201 = vmatprep.subr.mxu0 0.0
    %202 = vmatpush1.msra.mxu0 %v109
    %203 = vmatprep.subr.mxu0 0.0
    %204 = vmatpush1.msra.mxu0 %v110
    %205 = vmatprep.subr.mxu0 0.0
    %206 = vmatpush1.msra.mxu0 %v111
    %207 = vmatprep.subr.mxu0 0.0
    %208 = vmatpush1.msra.mxu0 %v112
    %209 = vmatprep.mubr.f32.mxu0 %v74
    %210 = vmatmul.mubr.f32.gmra.mrb[0].mxu0 %v73
    %v211 = vpop.f32.mrb[0].mxu0
    %v212 = vadd.f32 0.0, %v211
    %v213 = vpop.f32.mrb[0].mxu0
    %214 = vmatprep.mubr.f32.mxu0 %v78
    %215 = vmatmul.mubr.f32.gmra.mrb[0].mxu0 %v77
    %v216 = vpop.f32.mrb[0].mxu0
    %v217 = vadd.f32 0.0, %v216
    %v218 = vpop.f32.mrb[0].mxu0
    %219 = vdwg.mxu0
    %220 = vmatprep.subr.mxu0 0.0
    %221 = vmatpush1.msra.mxu0 %v113
    %222 = vmatprep.subr.mxu0 0.0
    %223 = vmatpush1.msra.mxu0 %v114
    %224 = vmatprep.subr.mxu0 0.0
    %225 = vmatpush1.msra.mxu0 %v115
    %226 = vmatprep.subr.mxu0 0.0
    %227 = vmatpush1.msra.mxu0 %v116
    %228 = vmatprep.subr.mxu0 0.0
    %229 = vmatpush1.msra.mxu0 %v117
    %230 = vmatprep.subr.mxu0 0.0
    %231 = vmatpush1.msra.mxu0 %v118
    %232 = vmatprep.subr.mxu0 0.0
    %233 = vmatpush1.msra.mxu0 %v119
    %234 = vmatprep.subr.mxu0 0.0
    %235 = vmatpush1.msra.mxu0 %v120
    %236 = vmatprep.subr.mxu0 0.0
    %237 = vmatpush1.msra.mxu0 %v121
    %238 = vmatprep.subr.mxu0 0.0
    %239 = vmatpush1.msra.mxu0 %v122
    %240 = vmatprep.subr.mxu0 0.0
    %241 = vmatpush1.msra.mxu0 %v123
    %242 = vmatprep.subr.mxu0 0.0
    %243 = vmatpush1.msra.mxu0 %v124
    %244 = vmatprep.subr.mxu0 0.0
    %245 = vmatpush1.msra.mxu0 %v125
    %246 = vmatprep.subr.mxu0 0.0
    %247 = vmatpush1.msra.mxu0 %v126
    %248 = vmatprep.subr.mxu0 0.0
    %249 = vmatpush1.msra.mxu0 %v127
    %250 = vmatprep.subr.mxu0 0.0
    %251 = vmatpush1.msra.mxu0 %v128
    %252 = vmatprep.subr.mxu0 0.0
    %253 = vmatpush1.msra.mxu0 %v129
    %254 = vmatprep.subr.mxu0 0.0
    %255 = vmatpush1.msra.mxu0 %v130
    %256 = vmatprep.subr.mxu0 0.0
    %257 = vmatpush1.msra.mxu0 %v131
    %258 = vmatprep.subr.mxu0 0.0
    %259 = vmatpush1.msra.mxu0 %v132
    %260 = vmatprep.subr.mxu0 0.0
    %261 = vmatpush1.msra.mxu0 %v133
    %262 = vmatprep.subr.mxu0 0.0
    %263 = vmatpush1.msra.mxu0 %v134
    %264 = vmatprep.subr.mxu0 0.0
    %265 = vmatpush1.msra.mxu0 %v135
    %266 = vmatprep.subr.mxu0 0.0
    %267 = vmatpush1.msra.mxu0 %v136
    %268 = vmatprep.subr.mxu0 0.0
    %269 = vmatpush1.msra.mxu0 %v137
    %270 = vmatprep.subr.mxu0 0.0
    %271 = vmatpush1.msra.mxu0 %v138
    %272 = vmatprep.subr.mxu0 0.0
    %273 = vmatpush1.msra.mxu0 %v139
    %274 = vmatprep.subr.mxu0 0.0
    %275 = vmatpush1.msra.mxu0 %v140
    %276 = vmatprep.subr.mxu0 0.0
    %277 = vmatpush1.msra.mxu0 %v141
    %278 = vmatprep.subr.mxu0 0.0
    %279 = vmatpush1.msra.mxu0 %v142
    %280 = vmatprep.subr.mxu0 0.0
    %281 = vmatpush1.msra.mxu0 %v143
    %282 = vmatprep.subr.mxu0 0.0
    %283 = vmatpush1.msra.mxu0 %v144
    %284 = vmatprep.mubr.f32.mxu0 %v76
    %285 = vmatmul.mubr.f32.gmra.mrb[0].mxu0 %v75
    %v286 = vpop.f32.mrb[0].mxu0
    %v287 = vadd.f32 %v212, %v286
    %v288 = vpop.f32.mrb[0].mxu0
    %289 = vmatprep.mubr.f32.mxu0 %v80
    %290 = vmatmul.mubr.f32.gmra.mrb[0].mxu0 %v79
    %v291 = vpop.f32.mrb[0].mxu0
    %v292 = vadd.f32 %v217, %v291
    %v293 = vpop.f32.mrb[0].mxu0
    %294 = vdwg.mxu0
    %v295 = vadd.f32 %v71, %v287
    %v296 = vadd.f32 %v72, %v292
    %297 = vst [vmem:[#allocation2] sm:$0xff] %v295
    %298 = vst [vmem:[#allocation2 + $0x8] sm:$0xff] %v296
    // Predicated region
    $region38: #{tpu_custom_call.1} parent=1 // pred_check
      %p299 = pneg %p65
    $region39: #{tpu_custom_call.1} parent=1 // pred_check_branch
      %301 = sbr.rel (%p299) target = $region41
    $region40: #{tpu_custom_call.1} parent=1 // pred_region
      %v302 = vld [vmem:[#allocation2] sm:$0xff]
      %v303 = vld [vmem:[#allocation2 + $0x8] sm:$0xff]
      %v304 = vld [vmem:[%s2] sm:$0x1]
      %v306 = vlaneseq
      %v307 = vshrl.u32 %v306, 7
      %v308 = vsub.s32 0, %v307
      %v309 = vrot.slane %v304, %v308
      %v311 = vadd.f32 %v302, %v309
      %v312 = vadd.f32 %v303, %v309
      %v313 = vmax.f32 %v311, 0.0
      %v314 = vmax.f32 %v312, 0.0
      %315 = vst [vmem:[#allocation10] sm:$0xff] %v313
      %316 = vst [vmem:[#allocation10 + $0x8] sm:$0xff] %v314
      %v317 = vld [vmem:[%s3] sm:$0x3]
      %v318 = vlaneseq
      %v319 = vand.u32 %v318, 127
      %vm320 = vcmp.eq.s32.totalorder %v319, 0
      %s321 = sld [smem:[#allocation9]]
      %v322 = vstv %s321
      %v323 = vsel %vm320, %v322, 0.0
      %vm324 = vcmp.eq.s32.totalorder %v319, 1
      %s325 = sld [smem:[#allocation9 + $0x1]]
      %v326 = vstv %s325
      %v327 = vsel %vm324, %v326, %v323
      %328 = vmatprep.subr.mxu0 0.0
      %329 = vmatpush1.xpose.msra.mxu0 %v317
      %330 = vmatprep.subr.mxu0 0.0
      %331 = vmatpush1.xpose.msra.mxu0 0.0
      %332 = vmatprep.subr.mxu0 0.0
      %333 = vmatpush1.xpose.msra.mxu0 0.0
      %334 = vmatprep.subr.mxu0 0.0
      %335 = vmatpush1.xpose.msra.mxu0 0.0
      %336 = vmatprep.subr.mxu0 0.0
      %337 = vmatpush1.xpose.msra.mxu0 0.0
      %338 = vmatprep.subr.mxu0 0.0
      %339 = vmatpush1.xpose.msra.mxu0 0.0
      %340 = vmatprep.subr.mxu0 0.0
      %341 = vmatpush1.xpose.msra.mxu0 0.0
      %342 = vmatprep.subr.mxu0 0.0
      %343 = vmatpush1.xpose.msra.mxu0 0.0
      %344 = vmatprep.subr.mxu0 0.0
      %345 = vmatpush1.xpose.msra.mxu0 0.0
      %346 = vmatprep.subr.mxu0 0.0
      %347 = vmatpush1.xpose.msra.mxu0 0.0
      %348 = vmatprep.subr.mxu0 0.0
      %349 = vmatpush1.xpose.msra.mxu0 0.0
      %350 = vmatprep.subr.mxu0 0.0
      %351 = vmatpush1.xpose.msra.mxu0 0.0
      %352 = vmatprep.subr.mxu0 0.0
      %353 = vmatpush1.xpose.msra.mxu0 0.0
      %354 = vmatprep.subr.mxu0 0.0
      %355 = vmatpush1.xpose.msra.mxu0 0.0
      %356 = vmatprep.subr.mxu0 0.0
      %357 = vmatpush1.xpose.msra.mxu0 0.0
      %358 = vmatprep.subr.mxu0 0.0
      %359 = vmatpush1.xpose.msra.mxu0 0.0
      %360 = vmatprep.subr.mxu0 0.0
      %361 = vmatpush1.xpose.msra.mxu0 0.0
      %362 = vmatprep.subr.mxu0 0.0
      %363 = vmatpush1.xpose.msra.mxu0 0.0
      %364 = vmatprep.subr.mxu0 0.0
      %365 = vmatpush1.xpose.msra.mxu0 0.0
      %366 = vmatprep.subr.mxu0 0.0
      %367 = vmatpush1.xpose.msra.mxu0 0.0
      %368 = vmatprep.subr.mxu0 0.0
      %369 = vmatpush1.xpose.msra.mxu0 0.0
      %370 = vmatprep.subr.mxu0 0.0
      %371 = vmatpush1.xpose.msra.mxu0 0.0
      %372 = vmatprep.subr.mxu0 0.0
      %373 = vmatpush1.xpose.msra.mxu0 0.0
      %374 = vmatprep.subr.mxu0 0.0
      %375 = vmatpush1.xpose.msra.mxu0 0.0
      %376 = vmatprep.subr.mxu0 0.0
      %377 = vmatpush1.xpose.msra.mxu0 0.0
      %378 = vmatprep.subr.mxu0 0.0
      %379 = vmatpush1.xpose.msra.mxu0 0.0
      %380 = vmatprep.subr.mxu0 0.0
      %381 = vmatpush1.xpose.msra.mxu0 0.0
      %382 = vmatprep.subr.mxu0 0.0
      %383 = vmatpush1.xpose.msra.mxu0 0.0
      %384 = vmatprep.subr.mxu0 0.0
      %385 = vmatpush1.xpose.msra.mxu0 0.0
      %386 = vmatprep.subr.mxu0 0.0
      %387 = vmatpush1.xpose.msra.mxu0 0.0
      %388 = vmatprep.subr.mxu0 0.0
      %389 = vmatpush1.xpose.msra.mxu0 0.0
      %390 = vmatprep.subr.mxu0 0.0
      %391 = vmatpush1.xpose.msra.mxu0 0.0
      %392 = vmatprep.mubr.f32.mxu0 0.0
      %393 = vmatmul.mubr.f32.gmra.mrb[0].mxu0 %v313
      %v394 = vpop.f32.mrb[0].mxu0
      %v395 = vadd.f32 %v327, %v394
      %v396 = vpop.f32.mrb[0].mxu0
      %397 = vmatprep.mubr.f32.mxu0 0.0
      %398 = vmatmul.mubr.f32.gmra.mrb[0].mxu0 %v314
      %v399 = vpop.f32.mrb[0].mxu0
      %v400 = vadd.f32 %v327, %v399
      %v401 = vpop.f32.mrb[0].mxu0
      %402 = vdwg.mxu0
      %vm403 = vcmask 15360
      %404 = vst.msk [vmem:[%s6] sm:$0xff] %vm403, %v395
      %405 = vst.msk [vmem:[%s6 + $0x8] sm:$0xff] %vm403, %v400
      %v406 = vsel %vm403, %v395, -inf
      %407 = vmax.xlane.f32.xlu0 %v406
      %v408 = vpop.xlane.xlu0 %407
      %v409 = vsel %vm403, %v400, -inf
      %410 = vmax.xlane.f32.xlu0 %v409
      %v411 = vpop.xlane.xlu0 %410
      %v412 = vsub.f32 %v395, %v408
      %v413 = vsub.f32 %v400, %v411
      %v414 = vmul.f32 %v412, 1.442695
      %v415 = vpow.pop %v414
      %v416 = vmul.f32 %v413, 1.442695
      %v417 = vpow.pop %v416
      %v418 = vsel %vm403, %v415, 0.0
      %419 = vadd.xlane.f32.xlu0 %v418
      %v420 = vpop.xlane.xlu0 %419
      %v421 = vsel %vm403, %v417, 0.0
      %422 = vadd.xlane.f32.xlu0 %v421
      %v423 = vpop.xlane.xlu0 %422
      %v424 = vlog2.pop %v420
      %v425 = vmul.f32 %v424, 0.6931472
      %v426 = vlog2.pop %v423
      %v427 = vmul.f32 %v426, 0.6931472
      %v428 = vsub.f32 %v412, %v425
      %v429 = vsub.f32 %v413, %v427
      %430 = vst.msk [vmem:[%s7] sm:$0xff] %vm403, %v428
      %431 = vst.msk [vmem:[%s7 + $0x8] sm:$0xff] %vm403, %v429
    $region41: #{tpu_custom_call.1} parent=1 // pred_fallthru
      _
    // Predicated region
    $region42: #{tpu_custom_call.1} parent=1 // pred_check
      _
    $region43: #{tpu_custom_call.1} parent=1 // pred_check_branch
      %433 = sbr.rel (0) target = $region45
    $region44: #{tpu_custom_call.1} parent=1 // pred_region
      %s435 = ssub.s32 256, 256
      %436 = vsyncadd [#allocation5], %s435
      %s437 = sshll.u32 [#allocation10], 4
      %s438 = int_to_ptr.vmem [resolvable:$true] %s437
      %443 = dma.vmem_to_hbm [thread:$0]  %s438, 256, %s5, [#allocation5], 128, 128, 8
    $region45: #{tpu_custom_call.1} parent=1 // pred_fallthru
      _
    // Predicated region
    $region46: #{tpu_custom_call.1} parent=1 // pred_check
      _
    $region47: #{tpu_custom_call.1} parent=1 // pred_check_branch
      %445 = sbr.rel (0) target = $region49
    $region48: #{tpu_custom_call.1} parent=1 // pred_region
      _
    $region49: #{tpu_custom_call.1} parent=1 // pred_fallthru
      _
    // Predicated region
    $region50: #{tpu_custom_call.1} parent=1 // pred_check
      _
    $region51: #{tpu_custom_call.1} parent=1 // pred_check_branch
      %447 = sbr.rel (0) target = $region53
    $region52: #{tpu_custom_call.1} parent=1 // pred_region
      _
    $region53: #{tpu_custom_call.1} parent=1 // pred_fallthru
      _
    // Predicated region
    $region54: #{tpu_custom_call.1} parent=1 // pred_check
      _
    $region55: #{tpu_custom_call.1} parent=1 // pred_check_branch
      %449 = sbr.rel (0) target = $region57
    $region56: #{tpu_custom_call.1} parent=1 // pred_region
      %450 = dma.done [#allocation5], 256
    $region57: #{tpu_custom_call.1} parent=1 // pred_fallthru
      _
    // Predicated region
    $region58: #{tpu_custom_call.1} parent=1 // pred_check
      _
    $region59: #{tpu_custom_call.1} parent=1 // pred_check_branch
      %452 = sbr.rel (0) target = $region61
    $region60: #{tpu_custom_call.1} parent=1 // pred_region
      _
    $region61: #{tpu_custom_call.1} parent=1 // pred_fallthru
      _
    // Predicated region
    $region62: #{tpu_custom_call.1} parent=1 // pred_check
      _
    $region63: #{tpu_custom_call.1} parent=1 // pred_check_branch
      %454 = sbr.rel (0) target = $region65
    $region64: #{tpu_custom_call.1} parent=1 // pred_region
      _
    $region65: #{tpu_custom_call.1} parent=1 // pred_fallthru
      _
    %455 = vsyncpa [#allocation4], 1
    %456 = vsyncpa [#allocation8], 1
    %457 = vsyncpa [#allocation5], 1
    %458 = vsyncpa [#allocation6], 1

</llo_original>
